<compile_context>
chip_gen: v7x
topology: tpu7x:2x2x1
jax: 0.10.0
libtpu: 0.0.40
codegen_flags: <defaults>
</compile_context>

<pallas_src>
import functools

import jax
import jax.numpy as jnp
from jax.experimental import pallas as pl
from jax.experimental.pallas import tpu as pltpu

# BERT special-token ids (bert-base-uncased)
CLS_ID = 101
SEP_ID = 102
PAD_ID = 0

MAX_LENGTH = 77          # module default

_BLOCK_BATCH = 4096      # batch tile for huge B (multiple of 8; ~5.5 MiB/step double-buffered)
_TC_SPLIT_MIN = 2048     # above this, force >=2 grid steps so v7x megacore can shard the batch
_MIN_PALLAS_BATCH = 256  # at/below this, the fused pure-JAX path wins (dispatch-overhead bound)


def _round_up(x, m):
    return ((x + m - 1) // m) * m


def _tokenizer_pad_kernel(raw_ref, len_ref, out_ref, *, n_keep):
    """Build BERT-style input_ids: [CLS] toks[:eff] [SEP] [PAD]... .

    raw_ref: (tb, n)  int raw wordpiece ids (columns >= n_keep ignored)
    len_ref: (tb, 1)  int per-example raw-token counts (clamped in-kernel)
    out_ref: (tb, L)  int32, L == max_length
    """
    tb, L = out_ref.shape

    raw = raw_ref[...].astype(jnp.int32)                         # (tb, n)
    eff = jnp.clip(len_ref[...].astype(jnp.int32), 0, n_keep)    # (tb, 1)

    # shifted[:, j] = raw[:, j-1]: content is laid out starting at lane 1 via a
    # single VMEM-register concatenate (no HBM traffic, no roll needed).
    parts = [jnp.zeros((tb, 1), jnp.int32)]
    if n_keep > 0:
        parts.append(raw[:, :n_keep])
    tail = L - 1 - n_keep
    if tail > 0:
        parts.append(jnp.zeros((tb, tail), jnp.int32))
    shifted = jnp.concatenate(parts, axis=1)                     # (tb, L)

    pos = jax.lax.broadcasted_iota(jnp.int32, (tb, L), 1)
    out_ref[...] = jnp.where(
        pos == 0,
        jnp.int32(CLS_ID),
        jnp.where(
            pos <= eff,
            shifted,
            jnp.where(pos == eff + 1, jnp.int32(SEP_ID), jnp.int32(PAD_ID)),
        ),
    )


def _reference(raw_ids, lengths, max_length=MAX_LENGTH):
    """Pure-JAX reference of the padding/truncation semantics (also the tiny-batch path)."""
    B, n = raw_ids.shape
    n_keep = min(n, max_length - 2)
    eff = jnp.clip(lengths.astype(jnp.int32), 0, n_keep).reshape(B, 1)
    content = raw_ids[:, :n_keep].astype(jnp.int32)
    shifted = jnp.concatenate(
        [jnp.zeros((B, 1), jnp.int32), content,
         jnp.zeros((B, max_length - 1 - n_keep), jnp.int32)], axis=1)
    pos = jnp.broadcast_to(jnp.arange(max_length, dtype=jnp.int32)[None, :],
                           (B, max_length))
    return jnp.where(
        pos == 0, CLS_ID,
        jnp.where(pos <= eff, shifted,
                  jnp.where(pos == eff + 1, SEP_ID, PAD_ID))).astype(jnp.int32)


def bert_tokenize_ids(raw_ids, lengths, max_length=MAX_LENGTH,
                      block_batch=_BLOCK_BATCH,
                      min_pallas_batch=_MIN_PALLAS_BATCH):
    """raw wordpiece ids -> padded input_ids (batch, max_length), int32.

    raw_ids:  (B, n) int raw token ids (anything past `lengths[b]` ignored)
    lengths:  (B,)   int number of valid raw tokens per example (clamped to [0, max_length-2])
    """
    B, n = raw_ids.shape
    n_keep = min(n, max_length - 2)

    # Tiny batch: one fused XLA elementwise kernel beats the Pallas launch.
    if B <= min_pallas_batch:
        return _reference(raw_ids, lengths, max_length)

    # Don't DMA an absurdly wide raw buffer when only n_keep columns can matter.
    if n > 3 * n_keep:
        raw_ids = raw_ids[:, :n_keep]
        n = n_keep

    lengths2d = lengths.reshape(B, 1)   # metadata-only reshape

    # Batch tile selection: single step for moderate B; >=2 steps once the DMA
    # outweighs the ~0.35us per-step overhead (lets v7x shard across 2 TCs).
    if B < _TC_SPLIT_MIN:
        tb = min(B, block_batch)
    else:
        tb = min(block_batch, _round_up(pl.cdiv(B, 2), 8))
    tb = min(tb, B)
    if tb != B:
        tb = _round_up(tb, 8)           # partial-batch blocks must be 8-aligned
    grid_b = pl.cdiv(B, tb)
    # No explicit batch padding: the ragged last tile's out-of-range stores are masked.

    kernel = functools.partial(_tokenizer_pad_kernel, n_keep=n_keep)
    out = pl.pallas_call(
        kernel,
        out_shape=jax.ShapeDtypeStruct((B, max_length), jnp.int32),
        grid=(grid_b,),
        in_specs=[pl.BlockSpec((tb, n), lambda i: (i, 0)),
                  pl.BlockSpec((tb, 1), lambda i: (i, 0))],
        out_specs=pl.BlockSpec((tb, max_length), lambda i: (i, 0)),
        compiler_params=pltpu.CompilerParams(
            dimension_semantics=("parallel",)),
    )(raw_ids, lengths2d)
    return out


class BERTTokenizerPallas:
    """vq_interface-compatible wrapper mirroring the PyTorch module API."""

    def __init__(self, vq_interface=True, max_length=MAX_LENGTH):
        self.vq_interface = vq_interface
        self.max_length = max_length

    def __call__(self, raw_ids, lengths):
        return bert_tokenize_ids(raw_ids, lengths, self.max_length)

    def encode(self, raw_ids, lengths):
        tokens = self(raw_ids, lengths)
        if not self.vq_interface:
            return tokens
        return (None, None, [None, None, tokens])

    def decode(self, x):
        return x


if __name__ == "__main__":
    key = jax.random.PRNGKey(0)
    B = 2
    RAW_LEN = 90  # longer than max_length - 2 to exercise truncation

    k1, k2 = jax.random.split(key)
    raw_ids = jax.random.randint(k1, (B, RAW_LEN), 1000, 30000, dtype=jnp.int32)
    lengths = jnp.array([10, 90], dtype=jnp.int32)  # one short (padded), one truncated

    # 1) Force the Pallas path at this tiny batch (default heuristic would pick pure JAX).
    tokens = bert_tokenize_ids(raw_ids, lengths, MAX_LENGTH, min_pallas_batch=0)
    tokens = jax.block_until_ready(tokens)
    ref = _reference(raw_ids, lengths, MAX_LENGTH)
    assert tokens.shape == (B, MAX_LENGTH)
    assert tokens.dtype == jnp.int32
    assert jnp.array_equal(tokens, ref), "mismatch vs reference"

    # sanity: CLS at 0, SEP at eff+1, PAD afterwards; truncated row has SEP at 76
    assert int(tokens[0, 0]) == CLS_ID
    assert int(tokens[0, 11]) == SEP_ID
    assert int(tokens[0, 12]) == PAD_ID
    assert int(tokens[1, 76]) == SEP_ID

    # 2) Ragged multi-tile path (grid of 3 with a partial last tile, no explicit padding),
    #    including negative and over-long lengths (clamped in-kernel).
    B2 = 20
    raw2 = jax.random.randint(k2, (B2, RAW_LEN), 1000, 30000, dtype=jnp.int32)
    len2 = jnp.arange(B2, dtype=jnp.int32) * 5 - 3
    tok2 = bert_tokenize_ids(raw2, len2, MAX_LENGTH, block_batch=8, min_pallas_batch=0)
    tok2 = jax.block_until_ready(tok2)
    assert jnp.array_equal(tok2, _reference(raw2, len2, MAX_LENGTH)), "ragged-tile mismatch"

    # 3) Default heuristic at tiny batch dispatches the fused pure-JAX path; same semantics.
    tok = BERTTokenizerPallas(vq_interface=True, max_length=MAX_LENGTH)
    assert jnp.array_equal(tok(raw_ids, lengths), ref)

    # vq_interface path, matching the PyTorch encode() return structure
    out = tok.encode(raw_ids, lengths)
    assert out[0] is None and out[1] is None and out[2][2].shape == (B, MAX_LENGTH)

    print("KERNEL_OK")
</pallas_src>

<mosaic_0001>
module attributes {stable_mosaic.version = 11 : i64} {
  func.func @_tokenizer_pad_kernel(%arg0: i32, %arg1: memref<2x90xi32, #tpu.memory_space<vmem>>, %arg2: memref<2x1xi32, #tpu.memory_space<vmem>>, %arg3: memref<2x77xi32, #tpu.memory_space<vmem>>) attributes {dimension_semantics = [#tpu.dimension_semantics<parallel>], iteration_bounds = array<i64: 1>, scalar_prefetch = 0 : i64, scratch_operands = 0 : i64, tpu.core_type = #tpu.core_type<tc>, window_params = [{transform_indices = @transform_0, window_bounds = array<i64: 2, 90>}, {transform_indices = @transform_1, window_bounds = array<i64: 2, 1>}, {transform_indices = @transform_2, window_bounds = array<i64: 2, 77>}]} {
    %c0 = arith.constant 0 : index
    %c0_0 = arith.constant 0 : index
    %0 = vector.load %arg1[%c0, %c0_0] : memref<2x90xi32, #tpu.memory_space<vmem>>, vector<2x90xi32>
    %c0_1 = arith.constant 0 : index
    %c0_2 = arith.constant 0 : index
    %1 = vector.load %arg2[%c0_1, %c0_2] : memref<2x1xi32, #tpu.memory_space<vmem>>, vector<2x1xi32>
    %c0_i32 = arith.constant 0 : i32
    %c75_i32 = arith.constant 75 : i32
    %2 = vector.broadcast %c0_i32 : i32 to vector<2x1xi32>
    %3 = arith.maxsi %2, %1 : vector<2x1xi32>
    %4 = vector.broadcast %c75_i32 : i32 to vector<2x1xi32>
    %5 = arith.minsi %4, %3 : vector<2x1xi32>
    %c0_i32_3 = arith.constant 0 : i32
    %6 = vector.broadcast %c0_i32_3 : i32 to vector<2x1xi32>
    %7 = vector.extract_strided_slice %0 {offsets = [0, 0], sizes = [2, 75], strides = [1, 1]} : vector<2x90xi32> to vector<2x75xi32>
    %c0_i32_4 = arith.constant 0 : i32
    %8 = vector.broadcast %c0_i32_4 : i32 to vector<2x1xi32>
    %9 = tpu.concatenate %6, %7, %8 in 1 : vector<2x1xi32>, vector<2x75xi32>, vector<2x1xi32> -> vector<2x77xi32>
    %10 = tpu.iota {dimensions = array<i32: 1>} : vector<2x77xi32>
    %c0_i32_5 = arith.constant 0 : i32
    %11 = vector.broadcast %c0_i32_5 : i32 to vector<2x77xi32>
    %12 = arith.cmpi eq, %10, %11 : vector<2x77xi32>
    %13 = vector.broadcast %5 : vector<2x1xi32> to vector<2x77xi32>
    %14 = arith.cmpi sle, %10, %13 : vector<2x77xi32>
    %c1_i32 = arith.constant 1 : i32
    %15 = vector.broadcast %c1_i32 : i32 to vector<2x1xi32>
    %16 = arith.addi %5, %15 : vector<2x1xi32>
    %17 = vector.broadcast %16 : vector<2x1xi32> to vector<2x77xi32>
    %18 = arith.cmpi eq, %10, %17 : vector<2x77xi32>
    %c102_i32 = arith.constant 102 : i32
    %c0_i32_6 = arith.constant 0 : i32
    %19 = vector.broadcast %c102_i32 : i32 to vector<2x77xi32>
    %20 = vector.broadcast %c0_i32_6 : i32 to vector<2x77xi32>
    %21 = arith.select %18, %19, %20 : vector<2x77xi1>, vector<2x77xi32>
    %22 = arith.select %14, %9, %21 : vector<2x77xi1>, vector<2x77xi32>
    %c101_i32 = arith.constant 101 : i32
    %23 = vector.broadcast %c101_i32 : i32 to vector<2x77xi32>
    %24 = arith.select %12, %23, %22 : vector<2x77xi1>, vector<2x77xi32>
    %c0_7 = arith.constant 0 : index
    %c0_8 = arith.constant 0 : index
    %25 = vector.load %arg3[%c0_7, %c0_8] : memref<2x77xi32, #tpu.memory_space<vmem>>, vector<2x77xi32>
    tpu.vector_store %arg3[%c0_7, %c0_8], %24 {strides = array<i32>} : memref<2x77xi32, #tpu.memory_space<vmem>>, vector<2x77xi32>,
    return
  }
  func.func @transform_0(%arg0: i32) -> (i32, i32) {
    %c0_i32 = arith.constant 0 : i32
    %c0_i32_0 = arith.constant 0 : i32
    return %arg0, %c0_i32 : i32, i32
  }
  func.func @transform_1(%arg0: i32) -> (i32, i32) {
    %c0_i32 = arith.constant 0 : i32
    %c0_i32_0 = arith.constant 0 : i32
    return %arg0, %c0_i32 : i32, i32
  }
  func.func @transform_2(%arg0: i32) -> (i32, i32) {
    %c0_i32 = arith.constant 0 : i32
    %c0_i32_0 = arith.constant 0 : i32
    return %arg0, %c0_i32 : i32, i32
  }
}

</mosaic_0001>

<llo_original>
// kernel: tpu_custom_call.1
$region0: #{tpu_custom_call.1}
  #allocation0 [shape = 'u32[]', space=smem, size = 0x4, offset = 0x4, fixed_abs, tag = 'smem constant byte address 0x4 - core index']
  #allocation1 [shape = 'u32[144,128]{1,0:T(1,128)}', space=vmem, size = 0x12000, scoped, tag = 'internal scratch']
  %s0 = inlined_call_operand.vmem [shape: s32[2,90], index: 0, kind: input, shape index: {}]
  %s1 = inlined_call_operand.vmem [shape: s32[2,1], index: 1, kind: input, shape index: {}]
  %s2 = inlined_call_operand.hbm [shape: s32[2,77], index: 2, kind: output, shape index: {}]
  %s3 = sld [smem:[#allocation0]]
  $region18: #{tpu_custom_call.1} parent=0
    _
  %s5 = ssub.s32 1, %s3
  %s6 = scalar_select 0, %s5, %s3
  $region1: #{tpu_custom_call.1} parent=0
    #allocation2 [shape = 'u8[1024]{0}', space=vmem, size = 0x400, scoped, tag = 'output window, operand 0, single buffered']
    #allocation3 [shape = 's32[1]{0}', space=sflag, size = 0x4, scoped, tag = 'scoped memory for tpu_custom_call.1']
    %7 = vsyncpa [#allocation3], 0
    // Predicated region
    $region2: #{tpu_custom_call.1} parent=1 // pred_check
      _
    $region3: #{tpu_custom_call.1} parent=1 // pred_check_branch
      %9 = sbr.rel (0) target = $region5
    $region4: #{tpu_custom_call.1} parent=1 // pred_region
      _
    $region5: #{tpu_custom_call.1} parent=1 // pred_fallthru
      _
    // Predicated region
    $region6: #{tpu_custom_call.1} parent=1 // pred_check
      _
    $region7: #{tpu_custom_call.1} parent=1 // pred_check_branch
      %11 = sbr.rel (0) target = $region9
    $region8: #{tpu_custom_call.1} parent=1 // pred_region
      _
    $region9: #{tpu_custom_call.1} parent=1 // pred_fallthru
      _
    %v12 = vld [vmem:[%s0] sm:$0x3]
    %v13 = vld [vmem:[%s1] sm:$0x3]
    %vm14 = vcmp.gt.s32.totalorder %v13, 0
    %v15 = vsel %vm14, %v13, 0
    %vm16 = vcmp.lt.s32.totalorder %v15, 75
    %v17 = vsel %vm16, %v15, 75
    %18 = vrot.lane.b32.xlu0 %v12, 1
    %v19 = vpop.permute.xlu0 %18
    %vm20 = vcmask 7168
    %v21 = vsel %vm20, 0, %v19
    %vm22 = vcmask 621568
    %v23 = vsel %vm22, %v21, 0
    %v24 = vlaneseq
    %v25 = vand.u32 %v24, 127
    %vm26 = vcmp.eq.s32.totalorder %v25, 0
    %27 = vset.pattern.permute.xlu0 0
    %28 = vperm.xlu0 %27, %v17
    %v29 = vpop.permute.xlu0 %28
    %vm30 = vcmp.le.s32.totalorder %v25, %v29
    %v31 = vadd.s32 %v17, 1
    %32 = vset.pattern.permute.xlu0 0
    %33 = vperm.xlu0 %32, %v31
    %v34 = vpop.permute.xlu0 %33
    %vm35 = vcmp.eq.s32.totalorder %v25, %v34
    %v36 = vsel %vm35, 102, 0
    %v37 = vsel %vm30, %v23, %v36
    %v38 = vsel %vm26, 101, %v37
    %vm39 = vcmask 623616
    %40 = vst.msk [vmem:[#allocation2] sm:$0x3] %vm39, %v38
    // Predicated region
    $region10: #{tpu_custom_call.1} parent=1 // pred_check
      _
    $region11: #{tpu_custom_call.1} parent=1 // pred_check_branch
      %42 = sbr.rel (0) target = $region13
    $region12: #{tpu_custom_call.1} parent=1 // pred_region
      %s44 = ssub.s32 32, 32
      %45 = vsyncadd [#allocation3], %s44
      %s47 = sshll.u32 [#allocation2], 4
      %s48 = int_to_ptr.vmem [resolvable:$true] %s47
      %50 = dma.vmem_to_hbm [thread:$0]  %s48, 32, %s2, [#allocation3]
    $region13: #{tpu_custom_call.1} parent=1 // pred_fallthru
      _
    // Predicated region
    $region14: #{tpu_custom_call.1} parent=1 // pred_check
      _
    $region15: #{tpu_custom_call.1} parent=1 // pred_check_branch
      %52 = sbr.rel (0) target = $region17
    $region16: #{tpu_custom_call.1} parent=1 // pred_region
      %53 = dma.done [#allocation3], 32
    $region17: #{tpu_custom_call.1} parent=1 // pred_fallthru
      _
    %54 = vsyncpa [#allocation3], 1

</llo_original>
